<compile_context>
chip_gen: v6e
topology: v6e:2x2x1
jax: 0.10.0
libtpu: 0.0.40
codegen_flags: <defaults>
</compile_context>

<pallas_src>
import functools

import jax
import jax.numpy as jnp
from jax.experimental import pallas as pl
from jax.experimental.pallas import tpu as pltpu


def _round_up(x, m):
    return ((x + m - 1) // m) * m


def _vmem_capacity_bytes():
    """Per-TensorCore VMEM capacity (falls back to 128 MiB if unqueryable)."""
    try:
        info = pltpu.get_tpu_info()
        cap = getattr(info, "vmem_capacity_bytes", None)
        if cap:
            return int(cap)
    except Exception:
        pass
    return 128 * 2 ** 20


def _gate_kernel_full(p_ref, f_ref, wp_ref, wf_ref, b_ref, o_ref):
    """Weight-resident path: single column tile (tn == E), 1-D grid over rows."""
    p = p_ref[...]
    f = f_ref[...]
    mm_dtype = wp_ref.dtype
    # Linear on the (virtual) concat: concat(p, f) @ W^T == p @ Wp^T + f @ Wf^T
    z = (
        jnp.dot(p.astype(mm_dtype), wp_ref[...], preferred_element_type=jnp.float32)
        + jnp.dot(f.astype(mm_dtype), wf_ref[...], preferred_element_type=jnp.float32)
        + b_ref[...]
    )
    g = jax.nn.sigmoid(z)
    pf = p.astype(jnp.float32)
    ff = f.astype(jnp.float32)
    # g*p + (1-g)*f  ==  f + g*(p - f)   (reuses the already-loaded p/f)
    o_ref[...] = (ff + g * (pf - ff)).astype(o_ref.dtype)


def _gate_kernel_tiled(p_ref, f_ref, wp_ref, wf_ref, b_ref, o_ref):
    """Large-E path: 2-D grid (row tiles x output-column tiles)."""
    tn = o_ref.shape[1]
    # Output-column offset of this grid step inside full E (tn is a 128-multiple).
    col = pl.multiple_of(pl.program_id(1) * tn, 128)

    p = p_ref[...]
    f = f_ref[...]
    mm_dtype = wp_ref.dtype
    z = (
        jnp.dot(p.astype(mm_dtype), wp_ref[...], preferred_element_type=jnp.float32)
        + jnp.dot(f.astype(mm_dtype), wf_ref[...], preferred_element_type=jnp.float32)
        + b_ref[...]
    )
    g = jax.nn.sigmoid(z)

    # Column slice of the activations matching this output tile.
    pc = p_ref[:, pl.ds(col, tn)].astype(jnp.float32)
    fc = f_ref[:, pl.ds(col, tn)].astype(jnp.float32)
    o_ref[...] = (fc + g * (pc - fc)).astype(o_ref.dtype)


def prepare_gate_params(weight, bias, weight_dtype=jnp.bfloat16):
    """One-time parameter prep (hoisted out of the forward pass).

    weight: (E, 2E) in PyTorch nn.Linear layout (out, in); bias: (E,).
    Returns (Wp^T, Wf^T, bias): weight halves pre-transposed and cast to
    `weight_dtype` (bf16 by default -> MXU-native, halves weight HBM/VMEM
    traffic).  Bias stays f32 (added to the f32 accumulator).  No padding:
    E is kept unpadded end-to-end.
    """
    E = weight.shape[0]
    wp_t = weight[:, :E].T.astype(weight_dtype)  # (E, E): half acting on `pooled`
    wf_t = weight[:, E:].T.astype(weight_dtype)  # (E, E): half acting on `feature`
    return wp_t, wf_t, bias.astype(jnp.float32).reshape(1, E)


@functools.partial(jax.jit, static_argnames=("tile_m", "tile_n"))
def gate_forward(pooled, feature, wp_t, wf_t, bias2, *, tile_m=512, tile_n=None):
    """pooled/feature: (..., E); (wp_t, wf_t, bias2) from prepare_gate_params."""
    orig_shape = pooled.shape
    E = orig_shape[-1]

    p2 = pooled.reshape(-1, E)
    f2 = feature.reshape(-1, E)
    M = p2.shape[0]

    itemsize = jnp.dtype(pooled.dtype).itemsize
    w_bytes = jnp.dtype(wp_t.dtype).itemsize
    sublane = {4: 8, 2: 16, 1: 32}.get(itemsize, 8)

    vmem_cap = _vmem_capacity_bytes()
    vmem_budget = int(0.8 * vmem_cap)  # never over-request (v7x TC has 64 MiB)

    # ------------------------------------------------------------------
    # Column tiling choice: keep the full (E, E) weight halves resident
    # whenever they fit comfortably (constant index_map -> fetched exactly
    # once, no per-row-tile re-fetch, full-width MXU N).
    # ------------------------------------------------------------------
    full_weight_bytes = 2 * (2 * E * E * w_bytes) + 2 * E * 4  # double-buffered alloc
    use_full = (E % 128 != 0) or (full_weight_bytes <= min(16 * 2 ** 20, vmem_budget // 2))
    if tile_n is not None:
        use_full = tile_n >= E or E % 128 != 0

    if use_full:
        # TODO(synk): pathological case (huge E that is not a 128 multiple) is
        # forced onto this path and may exceed VMEM; real embed dims are fine.
        per_row = (
            2 * 2 * E * itemsize  # pooled / feature blocks, double-buffered
            + 2 * E * itemsize    # output block, double-buffered
            + 4 * E * 4           # f32 intermediates (z, g, blend)
        )
        tm_budget = max(sublane, (vmem_budget - full_weight_bytes) // max(per_row, 1))
        tm = min(tile_m, tm_budget)
        tm = max(sublane, (tm // sublane) * sublane)
        if M <= tm:
            tm = M
        grid = (pl.cdiv(M, tm),)

        in_specs = [
            pl.BlockSpec((tm, E), lambda i: (i, 0)),  # pooled rows
            pl.BlockSpec((tm, E), lambda i: (i, 0)),  # feature rows
            pl.BlockSpec((E, E), lambda i: (0, 0)),   # Wp^T (resident, DMA'd once)
            pl.BlockSpec((E, E), lambda i: (0, 0)),   # Wf^T (resident, DMA'd once)
            pl.BlockSpec((1, E), lambda i: (0, 0)),   # bias (resident)
        ]
        out_specs = pl.BlockSpec((tm, E), lambda i: (i, 0))
        kernel = _gate_kernel_full
        dims = ("parallel",)
        tile_bytes = full_weight_bytes + tm * per_row
    else:
        # Column-tiled path (large E): stream weights by output-column tile.
        tn = tile_n if tile_n is not None else 0
        if not tn:
            # Prefer 256-multiples (v6e/v7x MXU is 2x256x256) that divide E.
            for cand in (512, 256, 384, 128):
                if cand <= E and E % cand == 0:
                    tn = cand
                    break
            else:
                tn = E
        weight_tile_bytes = 2 * (2 * E * tn * w_bytes) + 2 * tn * 4
        per_row = (
            2 * E * itemsize    # pooled / feature blocks, single-buffered
            + 2 * tn * itemsize  # output block, double-buffered
            + 4 * tn * 4         # f32 intermediates
        )
        tm_budget = max(sublane, (vmem_budget - weight_tile_bytes) // max(per_row, 1))
        tm = min(tile_m, tm_budget)
        tm = max(sublane, (tm // sublane) * sublane)
        if M <= tm:
            tm = M
        grid = (pl.cdiv(M, tm), E // tn)

        # Activations only change with the row index i -> a single buffer
        # suffices (saves tm*E bytes per operand; v7x VMEM headroom).
        in_specs = [
            pl.BlockSpec((tm, E), lambda i, j: (i, 0), pipeline_mode=pl.Buffered(1)),
            pl.BlockSpec((tm, E), lambda i, j: (i, 0), pipeline_mode=pl.Buffered(1)),
            pl.BlockSpec((E, tn), lambda i, j: (0, j)),  # Wp^T column tile
            pl.BlockSpec((E, tn), lambda i, j: (0, j)),  # Wf^T column tile
            pl.BlockSpec((1, tn), lambda i, j: (0, j)),  # bias column tile
        ]
        out_specs = pl.BlockSpec((tm, tn), lambda i, j: (i, j))
        kernel = _gate_kernel_tiled
        # Megacore shards rows; a column split would double activation traffic.
        dims = ("parallel", "arbitrary")
        tile_bytes = weight_tile_bytes + tm * per_row

    vmem_limit = min(vmem_budget, max(16 * 2 ** 20, int(1.5 * tile_bytes)))

    cost = pl.CostEstimate(
        flops=4 * M * E * E + 8 * M * E,      # two matmuls + elementwise blend
        transcendentals=M * E,                # sigmoid
        bytes_accessed=3 * M * E * itemsize + 2 * E * E * w_bytes + E * 4,
    )

    out = pl.pallas_call(
        kernel,
        out_shape=jax.ShapeDtypeStruct((M, E), pooled.dtype),
        grid_spec=pltpu.PrefetchScalarGridSpec(
            num_scalar_prefetch=0,
            grid=grid,
            in_specs=in_specs,
            out_specs=out_specs,
        ),
        compiler_params=pltpu.CompilerParams(
            dimension_semantics=dims,
            vmem_limit_bytes=vmem_limit,
        ),
        cost_estimate=cost,
    )(p2, f2, wp_t, wf_t, bias2)

    return out.reshape(orig_shape)


def init_gate_params(key, embed_dim, dtype=jnp.float32):
    # Matches nn.Linear(embed_dim*2, embed_dim) with xavier_normal_ weight and
    # zero bias.  PyTorch weight layout: (out_features, in_features).
    fan_in, fan_out = 2 * embed_dim, embed_dim
    std = (2.0 / (fan_in + fan_out)) ** 0.5
    weight = std * jax.random.normal(key, (embed_dim, 2 * embed_dim), dtype=dtype)
    bias = jnp.zeros((embed_dim,), dtype=dtype)
    return weight, bias


if __name__ == "__main__":
    key = jax.random.PRNGKey(0)
    k_w, k_p, k_f = jax.random.split(key, 3)

    B, S, E = 2, 8, 32
    weight, bias = init_gate_params(k_w, E)
    pooled = jax.random.normal(k_p, (B, S, E), dtype=jnp.float32)
    feature = jax.random.normal(k_f, (B, S, E), dtype=jnp.float32)

    # Pure-JAX reference.
    h = jnp.concatenate([pooled, feature], axis=-1)
    gate = jax.nn.sigmoid(h @ weight.T + bias)
    ref = gate * weight.dtype.type(1.0) * pooled + (1.0 - gate) * feature

    # f32-weight variant: exact-precision check.
    wp32, wf32, b32 = prepare_gate_params(weight, bias, weight_dtype=jnp.float32)
    out32 = jax.block_until_ready(gate_forward(pooled, feature, wp32, wf32, b32))
    assert out32.shape == ref.shape
    err32 = float(jnp.max(jnp.abs(out32 - ref)))
    assert err32 < 1e-5, f"f32 mismatch vs reference: {err32}"

    # Default bf16-weight variant (MXU-native); sigmoid gate is tolerant.
    wp_t, wf_t, b2 = prepare_gate_params(weight, bias)
    out = jax.block_until_ready(gate_forward(pooled, feature, wp_t, wf_t, b2))
    assert out.shape == ref.shape
    err = float(jnp.max(jnp.abs(out - ref)))
    assert err < 3e-2, f"bf16 mismatch vs reference: {err}"

    print("KERNEL_OK")
</pallas_src>

<mosaic_0001>
module attributes {stable_mosaic.version = 11 : i64} {
  func.func @_gate_kernel_full(%arg0: i32, %arg1: memref<16x32xf32, #tpu.memory_space<vmem>>, %arg2: memref<16x32xf32, #tpu.memory_space<vmem>>, %arg3: memref<32x32xf32, #tpu.memory_space<vmem>>, %arg4: memref<32x32xf32, #tpu.memory_space<vmem>>, %arg5: memref<1x32xf32, #tpu.memory_space<vmem>>, %arg6: memref<16x32xf32, #tpu.memory_space<vmem>>) attributes {dimension_semantics = [#tpu.dimension_semantics<parallel>], iteration_bounds = array<i64: 1>, scalar_prefetch = 0 : i64, scratch_operands = 0 : i64, tpu.core_type = #tpu.core_type<tc>, window_params = [{transform_indices = @transform_0, window_bounds = array<i64: 16, 32>}, {transform_indices = @transform_1, window_bounds = array<i64: 16, 32>}, {pipeline_mode = #tpu.pipeline_mode<synchronous>, transform_indices = @transform_2, window_bounds = array<i64: 32, 32>}, {pipeline_mode = #tpu.pipeline_mode<synchronous>, transform_indices = @transform_3, window_bounds = array<i64: 32, 32>}, {pipeline_mode = #tpu.pipeline_mode<synchronous>, transform_indices = @transform_4, window_bounds = array<i64: 1, 32>}, {transform_indices = @transform_5, window_bounds = array<i64: 16, 32>}]} {
    %c0 = arith.constant 0 : index
    %c0_0 = arith.constant 0 : index
    %0 = vector.load %arg1[%c0, %c0_0] : memref<16x32xf32, #tpu.memory_space<vmem>>, vector<16x32xf32>
    %c0_1 = arith.constant 0 : index
    %c0_2 = arith.constant 0 : index
    %1 = vector.load %arg2[%c0_1, %c0_2] : memref<16x32xf32, #tpu.memory_space<vmem>>, vector<16x32xf32>
    %c0_3 = arith.constant 0 : index
    %c0_4 = arith.constant 0 : index
    %2 = vector.load %arg3[%c0_3, %c0_4] : memref<32x32xf32, #tpu.memory_space<vmem>>, vector<32x32xf32>
    %cst = arith.constant dense<0.000000e+00> : vector<16x32xf32>
    %3 = tpu.matmul %0, %2, %cst {dimension_numbers = #tpu.dot_dimension_numbers<[1], [0], [0], [1], [0, 0, 1, 1], [], []>} : vector<16x32xf32>, vector<32x32xf32>, vector<16x32xf32> -> vector<16x32xf32>
    %c0_5 = arith.constant 0 : index
    %c0_6 = arith.constant 0 : index
    %4 = vector.load %arg4[%c0_5, %c0_6] : memref<32x32xf32, #tpu.memory_space<vmem>>, vector<32x32xf32>
    %cst_7 = arith.constant dense<0.000000e+00> : vector<16x32xf32>
    %5 = tpu.matmul %1, %4, %cst_7 {dimension_numbers = #tpu.dot_dimension_numbers<[1], [0], [0], [1], [0, 0, 1, 1], [], []>} : vector<16x32xf32>, vector<32x32xf32>, vector<16x32xf32> -> vector<16x32xf32>
    %6 = arith.addf %3, %5 : vector<16x32xf32>
    %c0_8 = arith.constant 0 : index
    %c0_9 = arith.constant 0 : index
    %7 = vector.load %arg5[%c0_8, %c0_9] : memref<1x32xf32, #tpu.memory_space<vmem>>, vector<1x32xf32>
    %8 = vector.broadcast %7 : vector<1x32xf32> to vector<16x32xf32>
    %9 = arith.addf %6, %8 : vector<16x32xf32>
    %10 = arith.negf %9 : vector<16x32xf32>
    %11 = math.exp %10 : vector<16x32xf32>
    %cst_10 = arith.constant 1.000000e+00 : f32
    %12 = vector.broadcast %cst_10 : f32 to vector<16x32xf32>
    %13 = arith.addf %12, %11 : vector<16x32xf32>
    %14 = arith.divf %12, %13 : vector<16x32xf32>
    %15 = arith.subf %0, %1 : vector<16x32xf32>
    %16 = arith.mulf %14, %15 : vector<16x32xf32>
    %17 = arith.addf %1, %16 : vector<16x32xf32>
    %c0_11 = arith.constant 0 : index
    %c0_12 = arith.constant 0 : index
    %18 = vector.load %arg6[%c0_11, %c0_12] : memref<16x32xf32, #tpu.memory_space<vmem>>, vector<16x32xf32>
    tpu.vector_store %arg6[%c0_11, %c0_12], %17 {strides = array<i32>} : memref<16x32xf32, #tpu.memory_space<vmem>>, vector<16x32xf32>,
    return
  }
  func.func @transform_0(%arg0: i32) -> (i32, i32) {
    %c0_i32 = arith.constant 0 : i32
    %c0_i32_0 = arith.constant 0 : i32
    return %arg0, %c0_i32 : i32, i32
  }
  func.func @transform_1(%arg0: i32) -> (i32, i32) {
    %c0_i32 = arith.constant 0 : i32
    %c0_i32_0 = arith.constant 0 : i32
    return %arg0, %c0_i32 : i32, i32
  }
  func.func @transform_2(%arg0: i32) -> (i32, i32) {
    %c0_i32 = arith.constant 0 : i32
    %c0_i32_0 = arith.constant 0 : i32
    %c0_i32_1 = arith.constant 0 : i32
    return %c0_i32, %c0_i32_0 : i32, i32
  }
  func.func @transform_3(%arg0: i32) -> (i32, i32) {
    %c0_i32 = arith.constant 0 : i32
    %c0_i32_0 = arith.constant 0 : i32
    %c0_i32_1 = arith.constant 0 : i32
    return %c0_i32, %c0_i32_0 : i32, i32
  }
  func.func @transform_4(%arg0: i32) -> (i32, i32) {
    %c0_i32 = arith.constant 0 : i32
    %c0_i32_0 = arith.constant 0 : i32
    %c0_i32_1 = arith.constant 0 : i32
    return %c0_i32, %c0_i32_0 : i32, i32
  }
  func.func @transform_5(%arg0: i32) -> (i32, i32) {
    %c0_i32 = arith.constant 0 : i32
    %c0_i32_0 = arith.constant 0 : i32
    return %arg0, %c0_i32 : i32, i32
  }
}

</mosaic_0001>

<llo_original>
// kernel: gate_forward.1
$region0: #{gate_forward.1}
  #allocation0 [shape = 'u32[]', space=smem, size = 0x4, offset = 0x4, fixed_abs, tag = 'smem constant byte address 0x4 - core index']
  #allocation1 [shape = 'u32[144,128]{1,0:T(1,128)}', space=vmem, size = 0x12000, scoped, tag = 'internal scratch']
  %s0 = inlined_call_operand.hbm [shape: f32[16,32], index: 0, kind: input, shape index: {}]
  %s1 = inlined_call_operand.hbm [shape: f32[16,32], index: 1, kind: input, shape index: {}]
  %s2 = inlined_call_operand.hbm [shape: f32[32,32], index: 2, kind: input, shape index: {}]
  %s3 = inlined_call_operand.hbm [shape: f32[32,32], index: 3, kind: input, shape index: {}]
  %s4 = inlined_call_operand.vmem [shape: f32[1,32], index: 4, kind: input, shape index: {}]
  %s5 = inlined_call_operand.hbm [shape: f32[16,32], index: 5, kind: output, shape index: {}]
  %s6 = sld [smem:[#allocation0]]
  $region46: #{gate_forward.1} parent=0
    _
  %s8 = ssub.s32 1, %s6
  %s9 = scalar_select 0, %s8, %s6
  $region1: #{gate_forward.1} parent=0
    #allocation2 [shape = 'u8[8192]{0}', space=vmem, size = 0x2000, scoped, tag = 'input window, operand 0, single buffered']
    #allocation3 [shape = 's32[1]{0}', space=sflag, size = 0x4, scoped, tag = 'scoped memory for gate_forward.1']
    #allocation4 [shape = 's32[1]{0}', space=sflag, size = 0x4, scoped, tag = 'scoped memory for gate_forward.1']
    #allocation5 [shape = 'u8[8192]{0}', space=vmem, size = 0x2000, scoped, tag = 'input window, operand 1, single buffered']
    #allocation6 [shape = 's32[1]{0}', space=sflag, size = 0x4, scoped, tag = 'scoped memory for gate_forward.1']
    #allocation7 [shape = 'u8[16384]{0}', space=vmem, size = 0x4000, scoped, tag = 'input window, operand 2, single buffered']
    #allocation8 [shape = 'u8[16384]{0}', space=vmem, size = 0x4000, scoped, tag = 'input window, operand 3, single buffered']
    #allocation9 [shape = 's32[1]{0}', space=sflag, size = 0x4, scoped, tag = 'scoped memory for gate_forward.1']
    #allocation10 [shape = 'u8[8192]{0}', space=vmem, size = 0x2000, scoped, tag = 'output window, operand 0, single buffered']
    %10 = vsyncpa [#allocation3], 0
    %11 = vsyncpa [#allocation6], 0
    %12 = vsyncpa [#allocation9], 0
    %13 = vsyncpa [#allocation4], 0
    // Predicated region
    $region2: #{gate_forward.1} parent=1 // pred_check
      _
    $region3: #{gate_forward.1} parent=1 // pred_check_branch
      %15 = sbr.rel (0) target = $region5
    $region4: #{gate_forward.1} parent=1 // pred_region
      %s17 = ssub.s32 256, 256
      %18 = vsyncadd [#allocation3], %s17
      %s19 = sshll.u32 [#allocation2], 4
      %s20 = int_to_ptr.vmem [resolvable:$true] %s19
      %25 = dma.hbm_to_vmem [thread:$0]  %s0, 256, %s20, [#allocation3], 128, 128, 8
    $region5: #{gate_forward.1} parent=1 // pred_fallthru
      _
    // Predicated region
    $region6: #{gate_forward.1} parent=1 // pred_check
      _
    $region7: #{gate_forward.1} parent=1 // pred_check_branch
      %27 = sbr.rel (0) target = $region9
    $region8: #{gate_forward.1} parent=1 // pred_region
      %s29 = ssub.s32 256, 256
      %30 = vsyncadd [#allocation6], %s29
      %s31 = sshll.u32 [#allocation5], 4
      %s32 = int_to_ptr.vmem [resolvable:$true] %s31
      %37 = dma.hbm_to_vmem [thread:$0]  %s1, 256, %s32, [#allocation6], 128, 128, 8
    $region9: #{gate_forward.1} parent=1 // pred_fallthru
      _
    // Predicated region
    $region10: #{gate_forward.1} parent=1 // pred_check
      _
    $region11: #{gate_forward.1} parent=1 // pred_check_branch
      %39 = sbr.rel (0) target = $region13
    $region12: #{gate_forward.1} parent=1 // pred_region
      %s41 = ssub.s32 512, 512
      %42 = vsyncadd [#allocation6], %s41
      %s43 = sshll.u32 [#allocation7], 4
      %s44 = int_to_ptr.vmem [resolvable:$true] %s43
      %49 = dma.hbm_to_vmem [thread:$0]  %s2, 512, %s44, [#allocation6], 128, 128, 8
    $region13: #{gate_forward.1} parent=1 // pred_fallthru
      _
    // Predicated region
    $region14: #{gate_forward.1} parent=1 // pred_check
      _
    $region15: #{gate_forward.1} parent=1 // pred_check_branch
      %51 = sbr.rel (0) target = $region17
    $region16: #{gate_forward.1} parent=1 // pred_region
      %s53 = ssub.s32 512, 512
      %54 = vsyncadd [#allocation9], %s53
      %s55 = sshll.u32 [#allocation8], 4
      %s56 = int_to_ptr.vmem [resolvable:$true] %s55
      %61 = dma.hbm_to_vmem [thread:$0]  %s3, 512, %s56, [#allocation9], 128, 128, 8
    $region17: #{gate_forward.1} parent=1 // pred_fallthru
      _
    // Predicated region
    $region18: #{gate_forward.1} parent=1 // pred_check
      _
    $region19: #{gate_forward.1} parent=1 // pred_check_branch
      %63 = sbr.rel (0) target = $region21
    $region20: #{gate_forward.1} parent=1 // pred_region
      _
    $region21: #{gate_forward.1} parent=1 // pred_fallthru
      _
    // Predicated region
    $region22: #{gate_forward.1} parent=1 // pred_check
      _
    $region23: #{gate_forward.1} parent=1 // pred_check_branch
      %65 = sbr.rel (0) target = $region25
    $region24: #{gate_forward.1} parent=1 // pred_region
      %66 = dma.done [#allocation3], 256
    $region25: #{gate_forward.1} parent=1 // pred_fallthru
      _
    // Predicated region
    $region26: #{gate_forward.1} parent=1 // pred_check
      _
    $region27: #{gate_forward.1} parent=1 // pred_check_branch
      %68 = sbr.rel (0) target = $region29
    $region28: #{gate_forward.1} parent=1 // pred_region
      %69 = dma.done [#allocation6], 256
    $region29: #{gate_forward.1} parent=1 // pred_fallthru
      _
    // Predicated region
    $region30: #{gate_forward.1} parent=1 // pred_check
      _
    $region31: #{gate_forward.1} parent=1 // pred_check_branch
      %71 = sbr.rel (0) target = $region33
    $region32: #{gate_forward.1} parent=1 // pred_region
      %72 = dma.done [#allocation6], 512
    $region33: #{gate_forward.1} parent=1 // pred_fallthru
      _
    // Predicated region
    $region34: #{gate_forward.1} parent=1 // pred_check
      _
    $region35: #{gate_forward.1} parent=1 // pred_check_branch
      %74 = sbr.rel (0) target = $region37
    $region36: #{gate_forward.1} parent=1 // pred_region
      %75 = dma.done [#allocation9], 512
    $region37: #{gate_forward.1} parent=1 // pred_fallthru
      _
    %v76 = vld [vmem:[#allocation2] sm:$0xff]
    %v77 = vld [vmem:[#allocation2 + $0x8] sm:$0xff]
    %v78 = vld [vmem:[#allocation5] sm:$0xff]
    %v79 = vld [vmem:[#allocation5 + $0x8] sm:$0xff]
    %v80 = vld [vmem:[#allocation7] sm:$0xff]
    %v81 = vld [vmem:[#allocation7 + $0x8] sm:$0xff]
    %v82 = vld [vmem:[#allocation7 + $0x10] sm:$0xff]
    %v83 = vld [vmem:[#allocation7 + $0x18] sm:$0xff]
    %v84 = vld [vmem:[#allocation8] sm:$0xff]
    %v85 = vld [vmem:[#allocation8 + $0x8] sm:$0xff]
    %v86 = vld [vmem:[#allocation8 + $0x10] sm:$0xff]
    %v87 = vld [vmem:[#allocation8 + $0x18] sm:$0xff]
    %vm88 = vcmask 261120
    %v90 = vsel %vm88, %v78, 0
    %v93 = vsel %vm88, %v79, 0
    %95 = vmatprep.subr.mxu0 0.0
    %96 = vmatpush1.msra.mxu0 0.0
    %97 = vmatprep.subr.mxu0 0.0
    %98 = vmatpush1.msra.mxu0 0.0
    %99 = vmatprep.subr.mxu0 0.0
    %100 = vmatpush1.msra.mxu0 0.0
    %101 = vmatprep.subr.mxu0 0.0
    %102 = vmatpush1.msra.mxu0 0.0
    %103 = vmatprep.subr.mxu0 0.0
    %104 = vmatpush1.msra.mxu0 0.0
    %105 = vmatprep.subr.mxu0 0.0
    %106 = vmatpush1.msra.mxu0 0.0
    %107 = vmatprep.subr.mxu0 0.0
    %108 = vmatpush1.msra.mxu0 0.0
    %109 = vmatprep.subr.mxu0 0.0
    %110 = vmatpush1.msra.mxu0 0.0
    %111 = vmatprep.subr.mxu0 0.0
    %112 = vmatpush1.msra.mxu0 0.0
    %113 = vmatprep.subr.mxu0 0.0
    %114 = vmatpush1.msra.mxu0 0.0
    %115 = vmatprep.subr.mxu0 0.0
    %116 = vmatpush1.msra.mxu0 0.0
    %117 = vmatprep.subr.mxu0 0.0
    %118 = vmatpush1.msra.mxu0 0.0
    %119 = vmatprep.subr.mxu0 0.0
    %120 = vmatpush1.msra.mxu0 %v87
    %121 = vmatprep.subr.mxu0 0.0
    %122 = vmatpush1.msra.mxu0 %v86
    %123 = vmatprep.subr.mxu0 0.0
    %124 = vmatpush1.msra.mxu0 %v85
    %125 = vmatprep.subr.mxu0 0.0
    %126 = vmatpush1.msra.mxu0 %v84
    %127 = vmatprep.subr.mxu0 0.0
    %128 = vmatpush2.msra.mxu0 0.0
    %129 = vmatprep.subr.mxu0 0.0
    %130 = vmatpush2.msra.mxu0 0.0
    %131 = vmatprep.subr.mxu0 0.0
    %132 = vmatpush2.msra.mxu0 0.0
    %133 = vmatprep.subr.mxu0 0.0
    %134 = vmatpush2.msra.mxu0 0.0
    %135 = vmatprep.subr.mxu0 0.0
    %136 = vmatpush2.msra.mxu0 0.0
    %137 = vmatprep.subr.mxu0 0.0
    %138 = vmatpush2.msra.mxu0 0.0
    %139 = vmatprep.subr.mxu0 0.0
    %140 = vmatpush2.msra.mxu0 0.0
    %141 = vmatprep.subr.mxu0 0.0
    %142 = vmatpush2.msra.mxu0 0.0
    %143 = vmatprep.subr.mxu0 0.0
    %144 = vmatpush2.msra.mxu0 0.0
    %145 = vmatprep.subr.mxu0 0.0
    %146 = vmatpush2.msra.mxu0 0.0
    %147 = vmatprep.subr.mxu0 0.0
    %148 = vmatpush2.msra.mxu0 0.0
    %149 = vmatprep.subr.mxu0 0.0
    %150 = vmatpush2.msra.mxu0 0.0
    %151 = vmatprep.subr.mxu0 0.0
    %152 = vmatpush2.msra.mxu0 0.0
    %153 = vmatprep.subr.mxu0 0.0
    %154 = vmatpush2.msra.mxu0 0.0
    %155 = vmatprep.subr.mxu0 0.0
    %156 = vmatpush2.msra.mxu0 0.0
    %157 = vmatprep.subr.mxu0 0.0
    %158 = vmatpush2.msra.mxu0 0.0
    %159 = vmatprep.mubr.f32.mxu0 0.0
    %160 = vmatmul.mubr.f32.gmra.mxu0 %v90
    %v161 = vpop.f32.mrf.mxu0
    %v162 = vadd.f32 0.0, %v161
    %v163 = vpop.f32.mrf.mxu0
    %164 = vmatprep.mubr.f32.mxu0 0.0
    %165 = vmatmul.mubr.f32.gmra.mxu0 %v93
    %v166 = vpop.f32.mrf.mxu0
    %v167 = vadd.f32 0.0, %v166
    %v168 = vpop.f32.mrf.mxu0
    %169 = vdwg.mxu0
    %v171 = vsel %vm88, %v76, 0
    %v174 = vsel %vm88, %v77, 0
    %176 = vmatprep.subr.mxu0 0.0
    %177 = vmatpush1.msra.mxu0 0.0
    %178 = vmatprep.subr.mxu0 0.0
    %179 = vmatpush1.msra.mxu0 0.0
    %180 = vmatprep.subr.mxu0 0.0
    %181 = vmatpush1.msra.mxu0 0.0
    %182 = vmatprep.subr.mxu0 0.0
    %183 = vmatpush1.msra.mxu0 0.0
    %184 = vmatprep.subr.mxu0 0.0
    %185 = vmatpush1.msra.mxu0 0.0
    %186 = vmatprep.subr.mxu0 0.0
    %187 = vmatpush1.msra.mxu0 0.0
    %188 = vmatprep.subr.mxu0 0.0
    %189 = vmatpush1.msra.mxu0 0.0
    %190 = vmatprep.subr.mxu0 0.0
    %191 = vmatpush1.msra.mxu0 0.0
    %192 = vmatprep.subr.mxu0 0.0
    %193 = vmatpush1.msra.mxu0 0.0
    %194 = vmatprep.subr.mxu0 0.0
    %195 = vmatpush1.msra.mxu0 0.0
    %196 = vmatprep.subr.mxu0 0.0
    %197 = vmatpush1.msra.mxu0 0.0
    %198 = vmatprep.subr.mxu0 0.0
    %199 = vmatpush1.msra.mxu0 0.0
    %200 = vmatprep.subr.mxu0 0.0
    %201 = vmatpush1.msra.mxu0 %v83
    %202 = vmatprep.subr.mxu0 0.0
    %203 = vmatpush1.msra.mxu0 %v82
    %204 = vmatprep.subr.mxu0 0.0
    %205 = vmatpush1.msra.mxu0 %v81
    %206 = vmatprep.subr.mxu0 0.0
    %207 = vmatpush1.msra.mxu0 %v80
    %208 = vmatprep.subr.mxu0 0.0
    %209 = vmatpush2.msra.mxu0 0.0
    %210 = vmatprep.subr.mxu0 0.0
    %211 = vmatpush2.msra.mxu0 0.0
    %212 = vmatprep.subr.mxu0 0.0
    %213 = vmatpush2.msra.mxu0 0.0
    %214 = vmatprep.subr.mxu0 0.0
    %215 = vmatpush2.msra.mxu0 0.0
    %216 = vmatprep.subr.mxu0 0.0
    %217 = vmatpush2.msra.mxu0 0.0
    %218 = vmatprep.subr.mxu0 0.0
    %219 = vmatpush2.msra.mxu0 0.0
    %220 = vmatprep.subr.mxu0 0.0
    %221 = vmatpush2.msra.mxu0 0.0
    %222 = vmatprep.subr.mxu0 0.0
    %223 = vmatpush2.msra.mxu0 0.0
    %224 = vmatprep.subr.mxu0 0.0
    %225 = vmatpush2.msra.mxu0 0.0
    %226 = vmatprep.subr.mxu0 0.0
    %227 = vmatpush2.msra.mxu0 0.0
    %228 = vmatprep.subr.mxu0 0.0
    %229 = vmatpush2.msra.mxu0 0.0
    %230 = vmatprep.subr.mxu0 0.0
    %231 = vmatpush2.msra.mxu0 0.0
    %232 = vmatprep.subr.mxu0 0.0
    %233 = vmatpush2.msra.mxu0 0.0
    %234 = vmatprep.subr.mxu0 0.0
    %235 = vmatpush2.msra.mxu0 0.0
    %236 = vmatprep.subr.mxu0 0.0
    %237 = vmatpush2.msra.mxu0 0.0
    %238 = vmatprep.subr.mxu0 0.0
    %239 = vmatpush2.msra.mxu0 0.0
    %240 = vmatprep.mubr.f32.mxu0 0.0
    %241 = vmatmul.mubr.f32.gmra.mxu0 %v171
    %v242 = vpop.f32.mrf.mxu0
    %v243 = vadd.f32 %v162, %v242
    %v244 = vpop.f32.mrf.mxu0
    %245 = vmatprep.mubr.f32.mxu0 0.0
    %246 = vmatmul.mubr.f32.gmra.mxu0 %v174
    %v247 = vpop.f32.mrf.mxu0
    %v248 = vadd.f32 %v167, %v247
    %v249 = vpop.f32.mrf.mxu0
    %250 = vdwg.mxu0
    %v251 = vld [vmem:[%s4] sm:$0x1]
    %v253 = vlaneseq
    %v254 = vshrl.u32 %v253, 7
    %v255 = vsub.s32 0, %v254
    %v256 = vrot.slane %v251, %v255
    %v258 = vadd.f32 %v243, %v256
    %v259 = vadd.f32 %v248, %v256
    %v260 = vxor.u32 %v258, 2147483648
    %v261 = vxor.u32 %v259, 2147483648
    %v262 = vmul.f32 %v260, 1.442695
    %v263 = vpow.pop %v262
    %v264 = vmul.f32 %v261, 1.442695
    %v265 = vpow.pop %v264
    %v266 = vadd.f32 %v263, 1.0
    %v267 = vadd.f32 %v265, 1.0
    %v268 = vrcp.pop %v266
    %v269 = vmul.f32 1.0, %v268
    %v270 = vrcp.pop %v267
    %v271 = vmul.f32 1.0, %v270
    %v272 = vsub.f32 %v76, %v78
    %v273 = vsub.f32 %v77, %v79
    %v274 = vmul.f32 %v269, %v272
    %v275 = vmul.f32 %v271, %v273
    %v276 = vadd.f32 %v78, %v274
    %v277 = vadd.f32 %v79, %v275
    %278 = vst.msk [vmem:[#allocation10] sm:$0xff] %vm88, %v276
    %279 = vst.msk [vmem:[#allocation10 + $0x8] sm:$0xff] %vm88, %v277
    // Predicated region
    $region38: #{gate_forward.1} parent=1 // pred_check
      _
    $region39: #{gate_forward.1} parent=1 // pred_check_branch
      %281 = sbr.rel (0) target = $region41
    $region40: #{gate_forward.1} parent=1 // pred_region
      %s283 = ssub.s32 256, 256
      %284 = vsyncadd [#allocation4], %s283
      %s285 = sshll.u32 [#allocation10], 4
      %s286 = int_to_ptr.vmem [resolvable:$true] %s285
      %291 = dma.vmem_to_hbm [thread:$0]  %s286, 256, %s5, [#allocation4], 128, 128, 8
    $region41: #{gate_forward.1} parent=1 // pred_fallthru
      _
    // Predicated region
    $region42: #{gate_forward.1} parent=1 // pred_check
      _
    $region43: #{gate_forward.1} parent=1 // pred_check_branch
      %293 = sbr.rel (0) target = $region45
    $region44: #{gate_forward.1} parent=1 // pred_region
      %294 = dma.done [#allocation4], 256
    $region45: #{gate_forward.1} parent=1 // pred_fallthru
      _
    %295 = vsyncpa [#allocation3], 1
    %296 = vsyncpa [#allocation6], 1
    %297 = vsyncpa [#allocation9], 1
    %298 = vsyncpa [#allocation4], 1

</llo_original>
